<compile_context>
chip_gen: v7x
topology: tpu7x:2x2x1
jax: 0.10.0
libtpu: 0.0.40
codegen_flags: <defaults>
</compile_context>

<pallas_src>
import functools

import jax
import jax.numpy as jnp
from jax.experimental import pallas as pl
from jax.experimental.pallas import tpu as pltpu

LN_EPS = 1e-5  # torch.nn.LayerNorm default


def _head_kernel(h1_ref, h2_ref, h3_ref,
                 gamma_ref, beta_ref,
                 wa_ref, wb_ref, wc_ref, bias_ref,
                 out_ref,
                 acc1_ref, acc2_ref, acc3_ref,
                 *, inv_seq_len):
    """Per (batch_tile, seq_tile) step:
       LayerNorm (one-pass stats) -> partial sum over the S tile -> accumulate.
       On the last S step: finish the mean, apply gamma/beta once on the
       pooled [bt,H], then the folded [3H]->1 head via VPU mul + lane reduce.
    """
    s_idx = pl.program_id(1)

    @pl.when(s_idx == 0)
    def _init():
        acc1_ref[...] = jnp.zeros_like(acc1_ref)
        acc2_ref[...] = jnp.zeros_like(acc2_ref)
        acc3_ref[...] = jnp.zeros_like(acc3_ref)

    def ln_tile_sum(h_ref):
        x = h_ref[...].astype(jnp.float32)                  # [bt, st, H] (bf16 -> f32 in-reg)
        inv_h = 1.0 / x.shape[-1]
        # one-pass statistics: sum(x) and sum(x*x)
        mu = jnp.sum(x, axis=-1, keepdims=True) * inv_h     # [bt, st, 1]
        ex2 = jnp.sum(x * x, axis=-1, keepdims=True) * inv_h
        var = ex2 - mu * mu
        xn = (x - mu) * jax.lax.rsqrt(var + LN_EPS)         # [bt, st, H]
        # gamma/beta deferred past the sequence mean (applied once in finalize)
        return jnp.sum(xn, axis=1)                          # [bt, H]

    acc1_ref[...] += ln_tile_sum(h1_ref)   # last hidden state
    acc2_ref[...] += ln_tile_sum(h2_ref)   # 2nd-to-last
    acc3_ref[...] += ln_tile_sum(h3_ref)   # 3rd-to-last

    @pl.when(s_idx == pl.num_programs(1) - 1)
    def _finalize():
        gamma = gamma_ref[...]                               # [1, H]
        beta = beta_ref[...]                                 # [1, H]
        p1 = acc1_ref[...] * inv_seq_len * gamma + beta      # [bt, H]
        p2 = acc2_ref[...] * inv_seq_len * gamma + beta
        p3 = acc3_ref[...] * inv_seq_len * gamma + beta
        # folded regressor1∘regressor2: three vector dots (VPU + XLU), no MXU
        z = (jnp.sum(p1 * wa_ref[...], axis=-1, keepdims=True)
             + jnp.sum(p2 * wb_ref[...], axis=-1, keepdims=True)
             + jnp.sum(p3 * wc_ref[...], axis=-1, keepdims=True)
             + bias_ref[0])                                  # scalar bias from SMEM
        out_ref[...] = z.astype(out_ref.dtype)               # single store, last step only


def bert_mean_pool_head(h1, h2, h3, gamma, beta, w1, b1, w2, b2,
                        *, batch_tile=None, seq_tile=None):
    """h1/h2/h3: [B,S,H] (bf16 recommended); gamma/beta: [H];
    w1: [3H,256] (in,out); b1: [256]; w2: [256,1] (in,out); b2: [1].
    Returns logits [B,1] float32."""
    B, S, H = h1.shape

    # ---- host-side parameter prep (f32) ----
    gamma2 = gamma.reshape(1, H).astype(jnp.float32)
    beta2 = beta.reshape(1, H).astype(jnp.float32)
    # Fold regressor2 into regressor1 (valid: no activation between them).
    w_eff = (w1.astype(jnp.float32) @ w2.astype(jnp.float32)).reshape(3 * H)   # [3H]
    b_eff = (b1.astype(jnp.float32) @ w2.astype(jnp.float32)
             + b2.astype(jnp.float32)).reshape(1)                              # [1]
    wa = w_eff[0 * H:1 * H].reshape(1, H)
    wb = w_eff[1 * H:2 * H].reshape(1, H)
    wc = w_eff[2 * H:3 * H].reshape(1, H)

    # ---- tile selection ----
    # Batch tile: multiple of 8 (or the full B when B < 8) for the (8,128) rule.
    if batch_tile is None:
        batch_tile = B if B < 8 else 8
    # Seq tile: largest that keeps 2 (double-buffer) x 3 inputs x bt*st*H*2B
    # well under scoped VMEM (~16/32/32 MiB on v5e/v6e/v7x; v7x has only
    # 64 MiB physical, so keep headroom). >=512 rows per tile reaches ~85% of
    # the HBM roofline on realistic shapes.
    if seq_tile is None:
        seq_tile = S if S <= 512 else 512
    assert B % batch_tile == 0 and (batch_tile % 8 == 0 or batch_tile == B)
    assert S % seq_tile == 0 and (seq_tile % 8 == 0 or seq_tile == S)
    nb, ns = B // batch_tile, S // seq_tile

    kernel = functools.partial(_head_kernel, inv_seq_len=1.0 / S)

    hs_spec = pl.BlockSpec((batch_tile, seq_tile, H), lambda b, s: (b, s, 0))
    vec_spec = pl.BlockSpec((1, H), lambda b, s: (0, 0))
    smem_spec = pl.BlockSpec(memory_space=pltpu.MemorySpace.SMEM)   # scalar bias

    grid_spec = pltpu.PrefetchScalarGridSpec(
        num_scalar_prefetch=0,
        grid=(nb, ns),
        in_specs=[hs_spec, hs_spec, hs_spec,          # h1, h2, h3 (bf16 S-tiles)
                  vec_spec, vec_spec,                 # gamma, beta
                  vec_spec, vec_spec, vec_spec,       # folded head weights
                  smem_spec],                         # folded head bias
        out_specs=pl.BlockSpec((batch_tile, 1), lambda b, s: (b, 0)),
        scratch_shapes=[pltpu.VMEM((batch_tile, H), jnp.float32)] * 3,
    )

    return pl.pallas_call(
        kernel,
        out_shape=jax.ShapeDtypeStruct((B, 1), jnp.float32),
        grid_spec=grid_spec,
        compiler_params=pltpu.CompilerParams(
            # batch is independent (megacore-shardable on v7x); S is the reduction
            dimension_semantics=("parallel", "arbitrary")),
    )(h1, h2, h3, gamma2, beta2, wa, wb, wc, b_eff)


def _reference(h1, h2, h3, gamma, beta, w1, b1, w2, b2):
    def ln(x):
        mu = jnp.mean(x, axis=-1, keepdims=True)
        var = jnp.mean((x - mu) ** 2, axis=-1, keepdims=True)
        return (x - mu) / jnp.sqrt(var + LN_EPS) * gamma + beta

    p1 = jnp.mean(ln(h1), axis=1)
    p2 = jnp.mean(ln(h2), axis=1)
    p3 = jnp.mean(ln(h3), axis=1)
    cat = jnp.concatenate([p1, p2, p3], axis=-1)
    return (cat @ w1 + b1) @ w2 + b2


if __name__ == "__main__":
    B, S, H = 2, 32, 32          # small shapes; S=32 with seq_tile=16 exercises
    HIDDEN1 = 256                # the reduction grid + accumulator path
    INIT_RANGE = 0.02            # BERT initializer_range

    key = jax.random.PRNGKey(0)
    k1, k2, k3, kw1, kw2 = jax.random.split(key, 5)

    # "Hidden states" from the (not re-implemented) backbone, shipped as bf16.
    h1 = jax.random.normal(k1, (B, S, H), jnp.float32).astype(jnp.bfloat16)
    h2 = jax.random.normal(k2, (B, S, H), jnp.float32).astype(jnp.bfloat16)
    h3 = jax.random.normal(k3, (B, S, H), jnp.float32).astype(jnp.bfloat16)

    # Deterministic parameter init mirroring Model._init_weights:
    gamma = jnp.ones((H,), jnp.float32)                     # LayerNorm weight = 1
    beta = jnp.zeros((H,), jnp.float32)                     # LayerNorm bias   = 0
    w1 = INIT_RANGE * jax.random.normal(kw1, (3 * H, HIDDEN1), jnp.float32)
    b1 = jnp.zeros((HIDDEN1,), jnp.float32)
    w2 = INIT_RANGE * jax.random.normal(kw2, (HIDDEN1, 1), jnp.float32)
    b2 = jnp.zeros((1,), jnp.float32)

    logits = bert_mean_pool_head(h1, h2, h3, gamma, beta, w1, b1, w2, b2,
                                 seq_tile=16)   # 2 sequence steps
    logits = jax.block_until_ready(logits)

    ref = _reference(h1.astype(jnp.float32), h2.astype(jnp.float32),
                     h3.astype(jnp.float32), gamma, beta, w1, b1, w2, b2)
    assert logits.shape == (B, 1)
    assert jnp.allclose(logits, ref, atol=1e-4, rtol=1e-3), (logits, ref)
    print("KERNEL_OK")
</pallas_src>

<mosaic_0001>
module attributes {stable_mosaic.version = 11 : i64} {
  func.func @_head_kernel(%arg0: i32, %arg1: i32, %arg2: memref<2x16x32xbf16, #tpu.memory_space<vmem>>, %arg3: memref<2x16x32xbf16, #tpu.memory_space<vmem>>, %arg4: memref<2x16x32xbf16, #tpu.memory_space<vmem>>, %arg5: memref<1x32xf32, #tpu.memory_space<vmem>>, %arg6: memref<1x32xf32, #tpu.memory_space<vmem>>, %arg7: memref<1x32xf32, #tpu.memory_space<vmem>>, %arg8: memref<1x32xf32, #tpu.memory_space<vmem>>, %arg9: memref<1x32xf32, #tpu.memory_space<vmem>>, %arg10: memref<1xf32, #tpu.memory_space<smem>>, %arg11: memref<2x1xf32, #tpu.memory_space<vmem>>, %arg12: memref<2x32xf32, #tpu.memory_space<vmem>>, %arg13: memref<2x32xf32, #tpu.memory_space<vmem>>, %arg14: memref<2x32xf32, #tpu.memory_space<vmem>>) attributes {dimension_semantics = [#tpu.dimension_semantics<parallel>, #tpu.dimension_semantics<arbitrary>], iteration_bounds = array<i64: 1, 2>, scalar_prefetch = 0 : i64, scratch_operands = 3 : i64, tpu.core_type = #tpu.core_type<tc>, window_params = [{transform_indices = @transform_0, window_bounds = array<i64: 2, 16, 32>}, {transform_indices = @transform_1, window_bounds = array<i64: 2, 16, 32>}, {transform_indices = @transform_2, window_bounds = array<i64: 2, 16, 32>}, {pipeline_mode = #tpu.pipeline_mode<synchronous>, transform_indices = @transform_3, window_bounds = array<i64: 1, 32>}, {pipeline_mode = #tpu.pipeline_mode<synchronous>, transform_indices = @transform_4, window_bounds = array<i64: 1, 32>}, {pipeline_mode = #tpu.pipeline_mode<synchronous>, transform_indices = @transform_5, window_bounds = array<i64: 1, 32>}, {pipeline_mode = #tpu.pipeline_mode<synchronous>, transform_indices = @transform_6, window_bounds = array<i64: 1, 32>}, {pipeline_mode = #tpu.pipeline_mode<synchronous>, transform_indices = @transform_7, window_bounds = array<i64: 1, 32>}, {transform_indices = @transform_8, window_bounds = array<i64: 1>}, {transform_indices = @transform_9, window_bounds = array<i64: 2, 1>}]} {
    %c0_i32 = arith.constant 0 : i32
    %0 = arith.cmpi eq, %arg1, %c0_i32 : i32
    %1 = arith.extui %0 : i1 to i32
    %c0_i32_0 = arith.constant 0 : i32
    %2 = arith.cmpi ne, %1, %c0_i32_0 : i32
    scf.if %2 {
      %cst_39 = arith.constant 0.000000e+00 : f32
      %78 = vector.broadcast %cst_39 : f32 to vector<2x32xf32>
      %c0_40 = arith.constant 0 : index
      %c0_41 = arith.constant 0 : index
      %79 = vector.load %arg12[%c0_40, %c0_41] : memref<2x32xf32, #tpu.memory_space<vmem>>, vector<2x32xf32>
      tpu.vector_store %arg12[%c0_40, %c0_41], %78 {strides = array<i32>} : memref<2x32xf32, #tpu.memory_space<vmem>>, vector<2x32xf32>,
      %cst_42 = arith.constant 0.000000e+00 : f32
      %80 = vector.broadcast %cst_42 : f32 to vector<2x32xf32>
      %c0_43 = arith.constant 0 : index
      %c0_44 = arith.constant 0 : index
      %81 = vector.load %arg13[%c0_43, %c0_44] : memref<2x32xf32, #tpu.memory_space<vmem>>, vector<2x32xf32>
      tpu.vector_store %arg13[%c0_43, %c0_44], %80 {strides = array<i32>} : memref<2x32xf32, #tpu.memory_space<vmem>>, vector<2x32xf32>,
      %cst_45 = arith.constant 0.000000e+00 : f32
      %82 = vector.broadcast %cst_45 : f32 to vector<2x32xf32>
      %c0_46 = arith.constant 0 : index
      %c0_47 = arith.constant 0 : index
      %83 = vector.load %arg14[%c0_46, %c0_47] : memref<2x32xf32, #tpu.memory_space<vmem>>, vector<2x32xf32>
      tpu.vector_store %arg14[%c0_46, %c0_47], %82 {strides = array<i32>} : memref<2x32xf32, #tpu.memory_space<vmem>>, vector<2x32xf32>,
    } else {
    }
    %c0 = arith.constant 0 : index
    %c0_1 = arith.constant 0 : index
    %3 = vector.load %arg12[%c0, %c0_1] : memref<2x32xf32, #tpu.memory_space<vmem>>, vector<2x32xf32>
    %c0_2 = arith.constant 0 : index
    %c0_3 = arith.constant 0 : index
    %c0_4 = arith.constant 0 : index
    %4 = vector.load %arg2[%c0_2, %c0_3, %c0_4] : memref<2x16x32xbf16, #tpu.memory_space<vmem>>, vector<2x16x32xbf16>
    %5 = arith.extf %4 : vector<2x16x32xbf16> to vector<2x16x32xf32>
    %cst = arith.constant dense<0.000000e+00> : vector<2x16xf32>
    %6 = vector.multi_reduction <add>, %5, %cst [2] : vector<2x16x32xf32> to vector<2x16xf32>
    %7 = vector.shape_cast %6 : vector<2x16xf32> to vector<2x16x1xf32>
    %cst_5 = arith.constant 3.125000e-02 : f32
    %8 = vector.broadcast %cst_5 : f32 to vector<2x16x1xf32>
    %9 = arith.mulf %7, %8 : vector<2x16x1xf32>
    %10 = arith.mulf %5, %5 : vector<2x16x32xf32>
    %cst_6 = arith.constant dense<0.000000e+00> : vector<2x16xf32>
    %11 = vector.multi_reduction <add>, %10, %cst_6 [2] : vector<2x16x32xf32> to vector<2x16xf32>
    %12 = vector.shape_cast %11 : vector<2x16xf32> to vector<2x16x1xf32>
    %cst_7 = arith.constant 3.125000e-02 : f32
    %13 = vector.broadcast %cst_7 : f32 to vector<2x16x1xf32>
    %14 = arith.mulf %12, %13 : vector<2x16x1xf32>
    %15 = arith.mulf %9, %9 : vector<2x16x1xf32>
    %16 = arith.subf %14, %15 : vector<2x16x1xf32>
    %17 = vector.broadcast %9 : vector<2x16x1xf32> to vector<2x16x32xf32>
    %18 = arith.subf %5, %17 : vector<2x16x32xf32>
    %cst_8 = arith.constant 9.99999974E-6 : f32
    %19 = vector.broadcast %cst_8 : f32 to vector<2x16x1xf32>
    %20 = arith.addf %16, %19 : vector<2x16x1xf32>
    %21 = math.rsqrt %20 : vector<2x16x1xf32>
    %22 = vector.broadcast %21 : vector<2x16x1xf32> to vector<2x16x32xf32>
    %23 = arith.mulf %18, %22 : vector<2x16x32xf32>
    %cst_9 = arith.constant dense<0.000000e+00> : vector<2x32xf32>
    %24 = vector.multi_reduction <add>, %23, %cst_9 [1] : vector<2x16x32xf32> to vector<2x32xf32>
    %25 = arith.addf %3, %24 : vector<2x32xf32>
    %c0_10 = arith.constant 0 : index
    %c0_11 = arith.constant 0 : index
    %26 = vector.load %arg12[%c0_10, %c0_11] : memref<2x32xf32, #tpu.memory_space<vmem>>, vector<2x32xf32>
    tpu.vector_store %arg12[%c0_10, %c0_11], %25 {strides = array<i32>} : memref<2x32xf32, #tpu.memory_space<vmem>>, vector<2x32xf32>,
    %c0_12 = arith.constant 0 : index
    %c0_13 = arith.constant 0 : index
    %27 = vector.load %arg13[%c0_12, %c0_13] : memref<2x32xf32, #tpu.memory_space<vmem>>, vector<2x32xf32>
    %c0_14 = arith.constant 0 : index
    %c0_15 = arith.constant 0 : index
    %c0_16 = arith.constant 0 : index
    %28 = vector.load %arg3[%c0_14, %c0_15, %c0_16] : memref<2x16x32xbf16, #tpu.memory_space<vmem>>, vector<2x16x32xbf16>
    %29 = arith.extf %28 : vector<2x16x32xbf16> to vector<2x16x32xf32>
    %cst_17 = arith.constant dense<0.000000e+00> : vector<2x16xf32>
    %30 = vector.multi_reduction <add>, %29, %cst_17 [2] : vector<2x16x32xf32> to vector<2x16xf32>
    %31 = vector.shape_cast %30 : vector<2x16xf32> to vector<2x16x1xf32>
    %cst_18 = arith.constant 3.125000e-02 : f32
    %32 = vector.broadcast %cst_18 : f32 to vector<2x16x1xf32>
    %33 = arith.mulf %31, %32 : vector<2x16x1xf32>
    %34 = arith.mulf %29, %29 : vector<2x16x32xf32>
    %cst_19 = arith.constant dense<0.000000e+00> : vector<2x16xf32>
    %35 = vector.multi_reduction <add>, %34, %cst_19 [2] : vector<2x16x32xf32> to vector<2x16xf32>
    %36 = vector.shape_cast %35 : vector<2x16xf32> to vector<2x16x1xf32>
    %cst_20 = arith.constant 3.125000e-02 : f32
    %37 = vector.broadcast %cst_20 : f32 to vector<2x16x1xf32>
    %38 = arith.mulf %36, %37 : vector<2x16x1xf32>
    %39 = arith.mulf %33, %33 : vector<2x16x1xf32>
    %40 = arith.subf %38, %39 : vector<2x16x1xf32>
    %41 = vector.broadcast %33 : vector<2x16x1xf32> to vector<2x16x32xf32>
    %42 = arith.subf %29, %41 : vector<2x16x32xf32>
    %cst_21 = arith.constant 9.99999974E-6 : f32
    %43 = vector.broadcast %cst_21 : f32 to vector<2x16x1xf32>
    %44 = arith.addf %40, %43 : vector<2x16x1xf32>
    %45 = math.rsqrt %44 : vector<2x16x1xf32>
    %46 = vector.broadcast %45 : vector<2x16x1xf32> to vector<2x16x32xf32>
    %47 = arith.mulf %42, %46 : vector<2x16x32xf32>
    %cst_22 = arith.constant dense<0.000000e+00> : vector<2x32xf32>
    %48 = vector.multi_reduction <add>, %47, %cst_22 [1] : vector<2x16x32xf32> to vector<2x32xf32>
    %49 = arith.addf %27, %48 : vector<2x32xf32>
    %c0_23 = arith.constant 0 : index
    %c0_24 = arith.constant 0 : index
    %50 = vector.load %arg13[%c0_23, %c0_24] : memref<2x32xf32, #tpu.memory_space<vmem>>, vector<2x32xf32>
    tpu.vector_store %arg13[%c0_23, %c0_24], %49 {strides = array<i32>} : memref<2x32xf32, #tpu.memory_space<vmem>>, vector<2x32xf32>,
    %c0_25 = arith.constant 0 : index
    %c0_26 = arith.constant 0 : index
    %51 = vector.load %arg14[%c0_25, %c0_26] : memref<2x32xf32, #tpu.memory_space<vmem>>, vector<2x32xf32>
    %c0_27 = arith.constant 0 : index
    %c0_28 = arith.constant 0 : index
    %c0_29 = arith.constant 0 : index
    %52 = vector.load %arg4[%c0_27, %c0_28, %c0_29] : memref<2x16x32xbf16, #tpu.memory_space<vmem>>, vector<2x16x32xbf16>
    %53 = arith.extf %52 : vector<2x16x32xbf16> to vector<2x16x32xf32>
    %cst_30 = arith.constant dense<0.000000e+00> : vector<2x16xf32>
    %54 = vector.multi_reduction <add>, %53, %cst_30 [2] : vector<2x16x32xf32> to vector<2x16xf32>
    %55 = vector.shape_cast %54 : vector<2x16xf32> to vector<2x16x1xf32>
    %cst_31 = arith.constant 3.125000e-02 : f32
    %56 = vector.broadcast %cst_31 : f32 to vector<2x16x1xf32>
    %57 = arith.mulf %55, %56 : vector<2x16x1xf32>
    %58 = arith.mulf %53, %53 : vector<2x16x32xf32>
    %cst_32 = arith.constant dense<0.000000e+00> : vector<2x16xf32>
    %59 = vector.multi_reduction <add>, %58, %cst_32 [2] : vector<2x16x32xf32> to vector<2x16xf32>
    %60 = vector.shape_cast %59 : vector<2x16xf32> to vector<2x16x1xf32>
    %cst_33 = arith.constant 3.125000e-02 : f32
    %61 = vector.broadcast %cst_33 : f32 to vector<2x16x1xf32>
    %62 = arith.mulf %60, %61 : vector<2x16x1xf32>
    %63 = arith.mulf %57, %57 : vector<2x16x1xf32>
    %64 = arith.subf %62, %63 : vector<2x16x1xf32>
    %65 = vector.broadcast %57 : vector<2x16x1xf32> to vector<2x16x32xf32>
    %66 = arith.subf %53, %65 : vector<2x16x32xf32>
    %cst_34 = arith.constant 9.99999974E-6 : f32
    %67 = vector.broadcast %cst_34 : f32 to vector<2x16x1xf32>
    %68 = arith.addf %64, %67 : vector<2x16x1xf32>
    %69 = math.rsqrt %68 : vector<2x16x1xf32>
    %70 = vector.broadcast %69 : vector<2x16x1xf32> to vector<2x16x32xf32>
    %71 = arith.mulf %66, %70 : vector<2x16x32xf32>
    %cst_35 = arith.constant dense<0.000000e+00> : vector<2x32xf32>
    %72 = vector.multi_reduction <add>, %71, %cst_35 [1] : vector<2x16x32xf32> to vector<2x32xf32>
    %73 = arith.addf %51, %72 : vector<2x32xf32>
    %c0_36 = arith.constant 0 : index
    %c0_37 = arith.constant 0 : index
    %74 = vector.load %arg14[%c0_36, %c0_37] : memref<2x32xf32, #tpu.memory_space<vmem>>, vector<2x32xf32>
    tpu.vector_store %arg14[%c0_36, %c0_37], %73 {strides = array<i32>} : memref<2x32xf32, #tpu.memory_space<vmem>>, vector<2x32xf32>,
    %c1_i32 = arith.constant 1 : i32
    %75 = arith.cmpi eq, %arg1, %c1_i32 : i32
    %76 = arith.extui %75 : i1 to i32
    %c0_i32_38 = arith.constant 0 : i32
    %77 = arith.cmpi ne, %76, %c0_i32_38 : i32
    scf.if %77 {
      %c0_39 = arith.constant 0 : index
      %c0_40 = arith.constant 0 : index
      %78 = vector.load %arg5[%c0_39, %c0_40] : memref<1x32xf32, #tpu.memory_space<vmem>>, vector<1x32xf32>
      %c0_41 = arith.constant 0 : index
      %c0_42 = arith.constant 0 : index
      %79 = vector.load %arg6[%c0_41, %c0_42] : memref<1x32xf32, #tpu.memory_space<vmem>>, vector<1x32xf32>
      %c0_43 = arith.constant 0 : index
      %c0_44 = arith.constant 0 : index
      %80 = vector.load %arg12[%c0_43, %c0_44] : memref<2x32xf32, #tpu.memory_space<vmem>>, vector<2x32xf32>
      %cst_45 = arith.constant 3.125000e-02 : f32
      %81 = vector.broadcast %cst_45 : f32 to vector<2x32xf32>
      %82 = arith.mulf %80, %81 : vector<2x32xf32>
      %83 = vector.broadcast %78 : vector<1x32xf32> to vector<2x32xf32>
      %84 = arith.mulf %82, %83 : vector<2x32xf32>
      %85 = vector.broadcast %79 : vector<1x32xf32> to vector<2x32xf32>
      %86 = arith.addf %84, %85 : vector<2x32xf32>
      %c0_46 = arith.constant 0 : index
      %c0_47 = arith.constant 0 : index
      %87 = vector.load %arg13[%c0_46, %c0_47] : memref<2x32xf32, #tpu.memory_space<vmem>>, vector<2x32xf32>
      %cst_48 = arith.constant 3.125000e-02 : f32
      %88 = vector.broadcast %cst_48 : f32 to vector<2x32xf32>
      %89 = arith.mulf %87, %88 : vector<2x32xf32>
      %90 = vector.broadcast %78 : vector<1x32xf32> to vector<2x32xf32>
      %91 = arith.mulf %89, %90 : vector<2x32xf32>
      %92 = vector.broadcast %79 : vector<1x32xf32> to vector<2x32xf32>
      %93 = arith.addf %91, %92 : vector<2x32xf32>
      %c0_49 = arith.constant 0 : index
      %c0_50 = arith.constant 0 : index
      %94 = vector.load %arg14[%c0_49, %c0_50] : memref<2x32xf32, #tpu.memory_space<vmem>>, vector<2x32xf32>
      %cst_51 = arith.constant 3.125000e-02 : f32
      %95 = vector.broadcast %cst_51 : f32 to vector<2x32xf32>
      %96 = arith.mulf %94, %95 : vector<2x32xf32>
      %97 = vector.broadcast %78 : vector<1x32xf32> to vector<2x32xf32>
      %98 = arith.mulf %96, %97 : vector<2x32xf32>
      %99 = vector.broadcast %79 : vector<1x32xf32> to vector<2x32xf32>
      %100 = arith.addf %98, %99 : vector<2x32xf32>
      %c0_52 = arith.constant 0 : index
      %c0_53 = arith.constant 0 : index
      %101 = vector.load %arg7[%c0_52, %c0_53] : memref<1x32xf32, #tpu.memory_space<vmem>>, vector<1x32xf32>
      %102 = vector.broadcast %101 : vector<1x32xf32> to vector<2x32xf32>
      %103 = arith.mulf %86, %102 : vector<2x32xf32>
      %cst_54 = arith.constant dense<0.000000e+00> : vector<2xf32>
      %104 = vector.multi_reduction <add>, %103, %cst_54 [1] : vector<2x32xf32> to vector<2xf32>
      %105 = vector.shape_cast %104 : vector<2xf32> to vector<2x1xf32>
      %c0_55 = arith.constant 0 : index
      %c0_56 = arith.constant 0 : index
      %106 = vector.load %arg8[%c0_55, %c0_56] : memref<1x32xf32, #tpu.memory_space<vmem>>, vector<1x32xf32>
      %107 = vector.broadcast %106 : vector<1x32xf32> to vector<2x32xf32>
      %108 = arith.mulf %93, %107 : vector<2x32xf32>
      %cst_57 = arith.constant dense<0.000000e+00> : vector<2xf32>
      %109 = vector.multi_reduction <add>, %108, %cst_57 [1] : vector<2x32xf32> to vector<2xf32>
      %110 = vector.shape_cast %109 : vector<2xf32> to vector<2x1xf32>
      %111 = arith.addf %105, %110 : vector<2x1xf32>
      %c0_58 = arith.constant 0 : index
      %c0_59 = arith.constant 0 : index
      %112 = vector.load %arg9[%c0_58, %c0_59] : memref<1x32xf32, #tpu.memory_space<vmem>>, vector<1x32xf32>
      %113 = vector.broadcast %112 : vector<1x32xf32> to vector<2x32xf32>
      %114 = arith.mulf %100, %113 : vector<2x32xf32>
      %cst_60 = arith.constant dense<0.000000e+00> : vector<2xf32>
      %115 = vector.multi_reduction <add>, %114, %cst_60 [1] : vector<2x32xf32> to vector<2xf32>
      %116 = vector.shape_cast %115 : vector<2xf32> to vector<2x1xf32>
      %117 = arith.addf %111, %116 : vector<2x1xf32>
      %c0_61 = arith.constant 0 : index
      %118 = memref.load %arg10[%c0_61] : memref<1xf32, #tpu.memory_space<smem>>
      %119 = vector.broadcast %118 : f32 to vector<2x1xf32>
      %120 = arith.addf %117, %119 : vector<2x1xf32>
      %c0_62 = arith.constant 0 : index
      %c0_63 = arith.constant 0 : index
      %121 = vector.load %arg11[%c0_62, %c0_63] : memref<2x1xf32, #tpu.memory_space<vmem>>, vector<2x1xf32>
      tpu.vector_store %arg11[%c0_62, %c0_63], %120 {strides = array<i32>} : memref<2x1xf32, #tpu.memory_space<vmem>>, vector<2x1xf32>,
    } else {
    }
    return
  }
  func.func @transform_0(%arg0: i32, %arg1: i32) -> (i32, i32, i32) {
    %c0_i32 = arith.constant 0 : i32
    %c0_i32_0 = arith.constant 0 : i32
    return %arg0, %arg1, %c0_i32 : i32, i32, i32
  }
  func.func @transform_1(%arg0: i32, %arg1: i32) -> (i32, i32, i32) {
    %c0_i32 = arith.constant 0 : i32
    %c0_i32_0 = arith.constant 0 : i32
    return %arg0, %arg1, %c0_i32 : i32, i32, i32
  }
  func.func @transform_2(%arg0: i32, %arg1: i32) -> (i32, i32, i32) {
    %c0_i32 = arith.constant 0 : i32
    %c0_i32_0 = arith.constant 0 : i32
    return %arg0, %arg1, %c0_i32 : i32, i32, i32
  }
  func.func @transform_3(%arg0: i32, %arg1: i32) -> (i32, i32) {
    %c0_i32 = arith.constant 0 : i32
    %c0_i32_0 = arith.constant 0 : i32
    %c0_i32_1 = arith.constant 0 : i32
    return %c0_i32, %c0_i32_0 : i32, i32
  }
  func.func @transform_4(%arg0: i32, %arg1: i32) -> (i32, i32) {
    %c0_i32 = arith.constant 0 : i32
    %c0_i32_0 = arith.constant 0 : i32
    %c0_i32_1 = arith.constant 0 : i32
    return %c0_i32, %c0_i32_0 : i32, i32
  }
  func.func @transform_5(%arg0: i32, %arg1: i32) -> (i32, i32) {
    %c0_i32 = arith.constant 0 : i32
    %c0_i32_0 = arith.constant 0 : i32
    %c0_i32_1 = arith.constant 0 : i32
    return %c0_i32, %c0_i32_0 : i32, i32
  }
  func.func @transform_6(%arg0: i32, %arg1: i32) -> (i32, i32) {
    %c0_i32 = arith.constant 0 : i32
    %c0_i32_0 = arith.constant 0 : i32
    %c0_i32_1 = arith.constant 0 : i32
    return %c0_i32, %c0_i32_0 : i32, i32
  }
  func.func @transform_7(%arg0: i32, %arg1: i32) -> (i32, i32) {
    %c0_i32 = arith.constant 0 : i32
    %c0_i32_0 = arith.constant 0 : i32
    %c0_i32_1 = arith.constant 0 : i32
    return %c0_i32, %c0_i32_0 : i32, i32
  }
  func.func @transform_8(%arg0: i32, %arg1: i32) -> i32 {
    %c0_i32 = arith.constant 0 : i32
    %c0_i32_0 = arith.constant 0 : i32
    return %c0_i32 : i32
  }
  func.func @transform_9(%arg0: i32, %arg1: i32) -> (i32, i32) {
    %c0_i32 = arith.constant 0 : i32
    %c0_i32_0 = arith.constant 0 : i32
    return %arg0, %c0_i32 : i32, i32
  }
}

</mosaic_0001>

<llo_original>
// kernel: tpu_custom_call.1
$region0: #{tpu_custom_call.1}
  #allocation0 [shape = 'u32[]', space=smem, size = 0x4, offset = 0x4, fixed_abs, tag = 'smem constant byte address 0x4 - core index']
  #allocation1 [shape = 'u32[144,128]{1,0:T(1,128)}', space=vmem, size = 0x12000, scoped, tag = 'internal scratch']
  #allocation2 [shape = 'f32[2,32]{1,0:T(2,128)}', space=vmem, size = 0x400, scoped, tag = 'scratch operand']
  #allocation3 [shape = 'f32[2,32]{1,0:T(2,128)}', space=vmem, size = 0x400, scoped, tag = 'scratch operand']
  #allocation4 [shape = 'f32[2,32]{1,0:T(2,128)}', space=vmem, size = 0x400, scoped, tag = 'scratch operand']
  #allocation5 [shape = 'f32[1]{0:T(128)S(6)}', space=smem, size = 0x200, scoped, tag = 'scoped memory for tpu_custom_call.1']
  #allocation11 [shape = 's32[]', space=sflag, size = 0x4, offset = 0, fixed_abs, tag = 'sflag constant byte address 0x0 - dummy sync flag']
  #allocation13 [shape = 's32[]', space=sflag, size = 0x4, offset = 0, fixed_abs, tag = 'sflag constant byte address 0x0 - dummy sync flag']
  #allocation15 [shape = 's32[]', space=sflag, size = 0x4, offset = 0, fixed_abs, tag = 'sflag constant byte address 0x0 - dummy sync flag']
  %s0 = inlined_call_operand.hbm [shape: bf16[2,32,32], index: 0, kind: input, shape index: {}]
  %s1 = inlined_call_operand.hbm [shape: bf16[2,32,32], index: 1, kind: input, shape index: {}]
  %s2 = inlined_call_operand.hbm [shape: bf16[2,32,32], index: 2, kind: input, shape index: {}]
  %s3 = inlined_call_operand.vmem [shape: f32[1,32], index: 3, kind: input, shape index: {}]
  %s4 = inlined_call_operand.vmem [shape: f32[1,32], index: 4, kind: input, shape index: {}]
  %s5 = inlined_call_operand.vmem [shape: f32[1,32], index: 5, kind: input, shape index: {}]
  %s6 = inlined_call_operand.vmem [shape: f32[1,32], index: 6, kind: input, shape index: {}]
  %s7 = inlined_call_operand.vmem [shape: f32[1,32], index: 7, kind: input, shape index: {}]
  %s8 = inlined_call_operand.<no memory space> [shape: f32[1], index: 8, kind: input, shape index: {}]
  %s9 = inlined_call_operand.vmem [shape: f32[2,1], index: 9, kind: output, shape index: {}]
  %s10 = sld [smem:[#allocation0]]
  $region89: #{tpu_custom_call.1} parent=0
    _
  %s12 = ssub.s32 1, %s10
  %s13 = scalar_select 0, %s12, %s10
  %14 = sst [smem:[#allocation5]] %s8
  $region1: #{tpu_custom_call.1} parent=0
    #allocation6 [shape = 'u8[16384]{0}', space=vmem, size = 0x4000, scoped, tag = 'input window, operand 0']
    #allocation7 [shape = 's32[2]{0}', space=sflag, size = 0x8, scoped, tag = 'scoped memory for tpu_custom_call.1']
    #allocation8 [shape = 'u8[16384]{0}', space=vmem, size = 0x4000, scoped, tag = 'input window, operand 1']
    #allocation9 [shape = 's32[2]{0}', space=sflag, size = 0x8, scoped, tag = 'scoped memory for tpu_custom_call.1']
    #allocation10 [shape = 'u8[16384]{0}', space=vmem, size = 0x4000, scoped, tag = 'input window, operand 2']
    %15 = vsyncpa [#allocation7], 0
    %s16 = scalar_lea.sflag [#allocation7], 1
    %17 = vsyncpa %s16, 0
    %18 = vsyncpa [#allocation9], 0
    %s19 = scalar_lea.sflag [#allocation9], 1
    %20 = vsyncpa %s19, 0
    loop: start=0, step=1, limit=4
    $region2: #{tpu_custom_call.1} parent=1 // loop_pre_header
      _
    $region3: #{tpu_custom_call.1} parent=1 // loop_header
      %s22 = sphi 0, %s26
      %p23 = scmp.ge.s32.totalorder %s22, 4
      %s29 = sphi 0, %s41
      %s30 = sphi 0, %s37
      %s31 = sphi 0, %s29
      %s32 = sphi 0, %s30
      %s33 = sphi 0, %s31
      %s34 = sphi 0, %s32
      %s46 = sphi 0, %s48
      %s49 = sphi 0, %s46
      %s50 = sphi 0, %s49
      %s66 = sphi 0, %s50
      %s74 = sphi 0, %s76
      %s77 = sphi 0, %s74
      %s78 = sphi 0, %s77
      %s94 = sphi 0, %s78
      %s102 = sphi 0, %s104
      %s105 = sphi 0, %s102
      %s106 = sphi 0, %s105
      %s122 = sphi 0, %s106
      %s126 = sphi 0, %s126
      %s128 = sphi 0, %s126
      %s129 = sphi 0, %s128
      %s143 = sphi 0, %s129
      %s147 = sphi 0, %s147
      %s149 = sphi 0, %s147
      %s150 = sphi 0, %s149
      %s164 = sphi 0, %s150
      %s168 = sphi 0, %s168
      %s170 = sphi 0, %s168
      %s171 = sphi 0, %s170
      %s185 = sphi 0, %s171
      %s189 = sphi 0, %s189
      %s191 = sphi 0, %s189
      %s192 = sphi 0, %s191
      %s206 = sphi 0, %s192
      %s210 = sphi 0, %s210
      %s212 = sphi 0, %s210
      %s213 = sphi 0, %s212
      %s227 = sphi 0, %s213
      %s231 = sphi 0, %s231
      %s233 = sphi 0, %s231
      %s234 = sphi 0, %s233
      %s248 = sphi 0, %s234
      %s254 = sphi 0, %s256
      %s257 = sphi 0, %s254
      %s258 = sphi 0, %s257
      %s274 = sphi 0, %s258
    $region4: #{tpu_custom_call.1} parent=1 // loop_header_branch
      %25 = sbr.rel (%p23) target = $region8
    $region5: #{tpu_custom_call.1} parent=1 // loop_body
      %s27 = ssub.s32 %s22, 1
      %s28 = ssub.s32 %s22, 2
      %s35 = sadd.s32 1, %s30
      %p36 = scmp.ge.s32.totalorder %s35, 2
      %s37 = scalar_select %p36, 0, %s35
      %s38 = sadd.s32 1, %s29
      %s39 = scalar_select %p36, %s38, %s29
      %p40 = scmp.ge.s32.totalorder %s39, 1
      %s41 = scalar_select %p40, 0, %s39
      %s42 = ssub.s32 %s29, %s41
      %s43 = ssub.s32 %s30, %s37
      %s44 = sor.u32 %s42, %s43
      %p45 = scmp.eq.s32.totalorder %s44, 0
      %s47 = sadd.s32 %s46, 1
      %s48 = scalar_select %p45, %s46, %s47
      %p51 = pneg %p45
      %p52 = scmp.eq.s32.totalorder %s22, 1
      %p53 = por %p51, %p52
      %p54 = scmp.ne.s32.totalorder %s46, %s49
      %p55 = scmp.eq.s32.totalorder %s22, 0
      %p56 = por %p54, %p55
      %p57 = scmp.ne.s32.totalorder %s46, %s49
      %p58 = scmp.eq.s32.totalorder %s27, 1
      %p59 = por %p57, %p58
      %p60 = scmp.ne.s32.totalorder %s49, %s50
      %p61 = scmp.eq.s32.totalorder %s27, 0
      %p62 = por %p60, %p61
      %p63 = scmp.ne.s32.totalorder %s49, %s50
      %p64 = scmp.eq.s32.totalorder %s28, 1
      %p65 = por %p63, %p64
      %p67 = scmp.ne.s32.totalorder %s50, %s66
      %p68 = scmp.eq.s32.totalorder %s28, 0
      %p69 = por %p67, %p68
      %s70 = ssub.s32 %s29, %s41
      %s71 = ssub.s32 %s30, %s37
      %s72 = sor.u32 %s70, %s71
      %p73 = scmp.eq.s32.totalorder %s72, 0
      %s75 = sadd.s32 %s74, 1
      %s76 = scalar_select %p73, %s74, %s75
      %p79 = pneg %p73
      %p80 = scmp.eq.s32.totalorder %s22, 1
      %p81 = por %p79, %p80
      %p82 = scmp.ne.s32.totalorder %s74, %s77
      %p83 = scmp.eq.s32.totalorder %s22, 0
      %p84 = por %p82, %p83
      %p85 = scmp.ne.s32.totalorder %s74, %s77
      %p86 = scmp.eq.s32.totalorder %s27, 1
      %p87 = por %p85, %p86
      %p88 = scmp.ne.s32.totalorder %s77, %s78
      %p89 = scmp.eq.s32.totalorder %s27, 0
      %p90 = por %p88, %p89
      %p91 = scmp.ne.s32.totalorder %s77, %s78
      %p92 = scmp.eq.s32.totalorder %s28, 1
      %p93 = por %p91, %p92
      %p95 = scmp.ne.s32.totalorder %s78, %s94
      %p96 = scmp.eq.s32.totalorder %s28, 0
      %p97 = por %p95, %p96
      %s98 = ssub.s32 %s29, %s41
      %s99 = ssub.s32 %s30, %s37
      %s100 = sor.u32 %s98, %s99
      %p101 = scmp.eq.s32.totalorder %s100, 0
      %s103 = sadd.s32 %s102, 1
      %s104 = scalar_select %p101, %s102, %s103
      %p107 = pneg %p101
      %p108 = scmp.eq.s32.totalorder %s22, 1
      %p109 = por %p107, %p108
      %p110 = scmp.ne.s32.totalorder %s102, %s105
      %p111 = scmp.eq.s32.totalorder %s22, 0
      %p112 = por %p110, %p111
      %p113 = scmp.ne.s32.totalorder %s102, %s105
      %p114 = scmp.eq.s32.totalorder %s27, 1
      %p115 = por %p113, %p114
      %p116 = scmp.ne.s32.totalorder %s105, %s106
      %p117 = scmp.eq.s32.totalorder %s27, 0
      %p118 = por %p116, %p117
      %p119 = scmp.ne.s32.totalorder %s105, %s106
      %p120 = scmp.eq.s32.totalorder %s28, 1
      %p121 = por %p119, %p120
      %p123 = scmp.ne.s32.totalorder %s106, %s122
      %p124 = scmp.eq.s32.totalorder %s28, 0
      %p125 = por %p123, %p124
      %s127 = sadd.s32 %s126, 1
      %p130 = scmp.eq.s32.totalorder %s22, 1
      %p131 = scmp.ne.s32.totalorder %s126, %s128
      %p132 = scmp.eq.s32.totalorder %s22, 0
      %p133 = por %p131, %p132
      %p134 = scmp.ne.s32.totalorder %s126, %s128
      %p135 = scmp.eq.s32.totalorder %s27, 1
      %p136 = por %p134, %p135
      %p137 = scmp.ne.s32.totalorder %s128, %s129
      %p138 = scmp.eq.s32.totalorder %s27, 0
      %p139 = por %p137, %p138
      %p140 = scmp.ne.s32.totalorder %s128, %s129
      %p141 = scmp.eq.s32.totalorder %s28, 1
      %p142 = por %p140, %p141
      %p144 = scmp.ne.s32.totalorder %s129, %s143
      %p145 = scmp.eq.s32.totalorder %s28, 0
      %p146 = por %p144, %p145
      %s148 = sadd.s32 %s147, 1
      %p151 = scmp.eq.s32.totalorder %s22, 1
      %p152 = scmp.ne.s32.totalorder %s147, %s149
      %p153 = scmp.eq.s32.totalorder %s22, 0
      %p154 = por %p152, %p153
      %p155 = scmp.ne.s32.totalorder %s147, %s149
      %p156 = scmp.eq.s32.totalorder %s27, 1
      %p157 = por %p155, %p156
      %p158 = scmp.ne.s32.totalorder %s149, %s150
      %p159 = scmp.eq.s32.totalorder %s27, 0
      %p160 = por %p158, %p159
      %p161 = scmp.ne.s32.totalorder %s149, %s150
      %p162 = scmp.eq.s32.totalorder %s28, 1
      %p163 = por %p161, %p162
      %p165 = scmp.ne.s32.totalorder %s150, %s164
      %p166 = scmp.eq.s32.totalorder %s28, 0
      %p167 = por %p165, %p166
      %s169 = sadd.s32 %s168, 1
      %p172 = scmp.eq.s32.totalorder %s22, 1
      %p173 = scmp.ne.s32.totalorder %s168, %s170
      %p174 = scmp.eq.s32.totalorder %s22, 0
      %p175 = por %p173, %p174
      %p176 = scmp.ne.s32.totalorder %s168, %s170
      %p177 = scmp.eq.s32.totalorder %s27, 1
      %p178 = por %p176, %p177
      %p179 = scmp.ne.s32.totalorder %s170, %s171
      %p180 = scmp.eq.s32.totalorder %s27, 0
      %p181 = por %p179, %p180
      %p182 = scmp.ne.s32.totalorder %s170, %s171
      %p183 = scmp.eq.s32.totalorder %s28, 1
      %p184 = por %p182, %p183
      %p186 = scmp.ne.s32.totalorder %s171, %s185
      %p187 = scmp.eq.s32.totalorder %s28, 0
      %p188 = por %p186, %p187
      %s190 = sadd.s32 %s189, 1
      %p193 = scmp.eq.s32.totalorder %s22, 1
      %p194 = scmp.ne.s32.totalorder %s189, %s191
      %p195 = scmp.eq.s32.totalorder %s22, 0
      %p196 = por %p194, %p195
      %p197 = scmp.ne.s32.totalorder %s189, %s191
      %p198 = scmp.eq.s32.totalorder %s27, 1
      %p199 = por %p197, %p198
      %p200 = scmp.ne.s32.totalorder %s191, %s192
      %p201 = scmp.eq.s32.totalorder %s27, 0
      %p202 = por %p200, %p201
      %p203 = scmp.ne.s32.totalorder %s191, %s192
      %p204 = scmp.eq.s32.totalorder %s28, 1
      %p205 = por %p203, %p204
      %p207 = scmp.ne.s32.totalorder %s192, %s206
      %p208 = scmp.eq.s32.totalorder %s28, 0
      %p209 = por %p207, %p208
      %s211 = sadd.s32 %s210, 1
      %p214 = scmp.eq.s32.totalorder %s22, 1
      %p215 = scmp.ne.s32.totalorder %s210, %s212
      %p216 = scmp.eq.s32.totalorder %s22, 0
      %p217 = por %p215, %p216
      %p218 = scmp.ne.s32.totalorder %s210, %s212
      %p219 = scmp.eq.s32.totalorder %s27, 1
      %p220 = por %p218, %p219
      %p221 = scmp.ne.s32.totalorder %s212, %s213
      %p222 = scmp.eq.s32.totalorder %s27, 0
      %p223 = por %p221, %p222
      %p224 = scmp.ne.s32.totalorder %s212, %s213
      %p225 = scmp.eq.s32.totalorder %s28, 1
      %p226 = por %p224, %p225
      %p228 = scmp.ne.s32.totalorder %s213, %s227
      %p229 = scmp.eq.s32.totalorder %s28, 0
      %p230 = por %p228, %p229
      %s232 = sadd.s32 %s231, 1
      %p235 = scmp.eq.s32.totalorder %s22, 1
      %p236 = scmp.ne.s32.totalorder %s231, %s233
      %p237 = scmp.eq.s32.totalorder %s22, 0
      %p238 = por %p236, %p237
      %p239 = scmp.ne.s32.totalorder %s231, %s233
      %p240 = scmp.eq.s32.totalorder %s27, 1
      %p241 = por %p239, %p240
      %p242 = scmp.ne.s32.totalorder %s233, %s234
      %p243 = scmp.eq.s32.totalorder %s27, 0
      %p244 = por %p242, %p243
      %p245 = scmp.ne.s32.totalorder %s233, %s234
      %p246 = scmp.eq.s32.totalorder %s28, 1
      %p247 = por %p245, %p246
      %p249 = scmp.ne.s32.totalorder %s234, %s248
      %p250 = scmp.eq.s32.totalorder %s28, 0
      %p251 = por %p249, %p250
      %s252 = ssub.s32 %s29, %s41
      %p253 = scmp.eq.s32.totalorder %s252, 0
      %s255 = sadd.s32 %s254, 1
      %s256 = scalar_select %p253, %s254, %s255
      %p259 = pneg %p253
      %p260 = scmp.eq.s32.totalorder %s22, 1
      %p261 = por %p259, %p260
      %p262 = scmp.ne.s32.totalorder %s254, %s257
      %p263 = scmp.eq.s32.totalorder %s22, 0
      %p264 = por %p262, %p263
      %p265 = scmp.ne.s32.totalorder %s254, %s257
      %p266 = scmp.eq.s32.totalorder %s27, 1
      %p267 = por %p265, %p266
      %p268 = scmp.ne.s32.totalorder %s257, %s258
      %p269 = scmp.eq.s32.totalorder %s27, 0
      %p270 = por %p268, %p269
      %p271 = scmp.ne.s32.totalorder %s257, %s258
      %p272 = scmp.eq.s32.totalorder %s28, 1
      %p273 = por %p271, %p272
      %p275 = scmp.ne.s32.totalorder %s258, %s274
      %p276 = scmp.eq.s32.totalorder %s28, 0
      %p277 = por %p275, %p276
      %p278 = scmp.le.s32.totalorder 1, %s22
      %p279 = scmp.lt.s32.totalorder %s22, 3
      %p280 = pnand %p278, %p279
      %p281 = pneg %p280
      // Predicated region
      $region9: #{tpu_custom_call.1} parent=5 // pred_check
        _
      $region10: #{tpu_custom_call.1} parent=5 // pred_check_branch
        %283 = sbr.rel (%p280) target = $region12
      $region11: #{tpu_custom_call.1} parent=5 // pred_region
        %s284 = ssub.s32 %s22, 1
        // Predicated region
        $region13: #{tpu_custom_call.1} parent=11 // pred_check
          %p285 = pneg %p139
        $region14: #{tpu_custom_call.1} parent=11 // pred_check_branch
          %287 = sbr.rel (%p285) target = $region16
        $region15: #{tpu_custom_call.1} parent=11 // pred_region
          _
        $region16: #{tpu_custom_call.1} parent=11 // pred_fallthru
          _
        // Predicated region
        $region17: #{tpu_custom_call.1} parent=11 // pred_check
          %p288 = pneg %p160
        $region18: #{tpu_custom_call.1} parent=11 // pred_check_branch
          %290 = sbr.rel (%p288) target = $region20
        $region19: #{tpu_custom_call.1} parent=11 // pred_region
          _
        $region20: #{tpu_custom_call.1} parent=11 // pred_fallthru
          _
        // Predicated region
        $region21: #{tpu_custom_call.1} parent=11 // pred_check
          %p291 = pneg %p181
        $region22: #{tpu_custom_call.1} parent=11 // pred_check_branch
          %293 = sbr.rel (%p291) target = $region24
        $region23: #{tpu_custom_call.1} parent=11 // pred_region
          _
        $region24: #{tpu_custom_call.1} parent=11 // pred_fallthru
          _
        // Predicated region
        $region25: #{tpu_custom_call.1} parent=11 // pred_check
          %p294 = pneg %p202
        $region26: #{tpu_custom_call.1} parent=11 // pred_check_branch
          %296 = sbr.rel (%p294) target = $region28
        $region27: #{tpu_custom_call.1} parent=11 // pred_region
          _
        $region28: #{tpu_custom_call.1} parent=11 // pred_fallthru
          _
        // Predicated region
        $region29: #{tpu_custom_call.1} parent=11 // pred_check
          %p297 = pneg %p223
        $region30: #{tpu_custom_call.1} parent=11 // pred_check_branch
          %299 = sbr.rel (%p297) target = $region32
        $region31: #{tpu_custom_call.1} parent=11 // pred_region
          _
        $region32: #{tpu_custom_call.1} parent=11 // pred_fallthru
          _
        // Predicated region
        $region33: #{tpu_custom_call.1} parent=11 // pred_check
          %p300 = pneg %p244
        $region34: #{tpu_custom_call.1} parent=11 // pred_check_branch
          %302 = sbr.rel (%p300) target = $region36
        $region35: #{tpu_custom_call.1} parent=11 // pred_region
          _
        $region36: #{tpu_custom_call.1} parent=11 // pred_fallthru
          _
      $region12: #{tpu_custom_call.1} parent=5 // pred_fallthru
        _
      %p303 = scmp.lt.s32.totalorder %s22, 2
      // Predicated region
      $region37: #{tpu_custom_call.1} parent=5 // pred_check
        %p304 = pneg %p303
      $region38: #{tpu_custom_call.1} parent=5 // pred_check_branch
        %306 = sbr.rel (%p304) target = $region40
      $region39: #{tpu_custom_call.1} parent=5 // pred_region
        // Predicated region
        $region41: #{tpu_custom_call.1} parent=39 // pred_check
          %p307 = pneg %p56
        $region42: #{tpu_custom_call.1} parent=39 // pred_check_branch
          %309 = sbr.rel (%p307) target = $region44
        $region43: #{tpu_custom_call.1} parent=39 // pred_region
          #allocation12 [shape = 'u32[6]{0}', space=smem, size = 0x18, scoped, tag = 'DMA stride descriptor']
          %s310 = sand.u32 %s46, 1
          %s311 = scalar_lea.sflag [#allocation7], %s310
          %s312 = sand.u32 %s46, 1
          %s313 = smul.addr %s312, 16
          %s314 = scalar_lea.vmem [#allocation6], %s313
          %s315 = smul.u32 2, %s29
          %s316 = smul.u32 2, %s30
          %s318 = ssub.s32 256, 256
          %319 = vsyncadd %s311, %s318
          %s320 = smul.addr %s315, 4
          %s321 = sadd.s32 %s316, %s320
          %s322 = smul.addr %s321, 64
          %s323 = scalar_lea.hbm %s0, %s322
          %s325 = sshll.u32 1, 14
          %s326 = sxor.u32 4294967295, %s325
          %s328 = sld [smem:[#allocation0]]
          %s329 = sadd.s32 2, %s328
          %s331 = sshll.u32 7, 26
          %s332 = sxor.u32 4294967295, %s331
          %s333 = sand.u32 0, %s332
          %s334 = sshll.u32 %s329, 26
          %s335 = sor.u32 %s333, %s334
          %s336 = sshll.u32 %s314, 4
          %s337 = int_to_ptr.vmem [resolvable:$true] %s336
          %343 = sst [smem:[#allocation12]] 256
          %s344 = scalar_lea.smem [#allocation12], 1
          %345 = sst [smem:[%s344]] 128
          %s346 = scalar_lea.smem [#allocation12], 2
          %347 = sst [smem:[%s346]] 2
          %s348 = scalar_lea.smem [#allocation12], 3
          %349 = sst [smem:[%s348]] 64
          %s350 = scalar_lea.smem [#allocation12], 4
          %351 = sst [smem:[%s350]] 64
          %s352 = scalar_lea.smem [#allocation12], 5
          %353 = sst [smem:[%s352]] 4
          %355 = dma.general %s323, 256, %s337, %s311, [#allocation11], [#allocation12], %s335, 0
        $region44: #{tpu_custom_call.1} parent=39 // pred_fallthru
          _
        // Predicated region
        $region45: #{tpu_custom_call.1} parent=39 // pred_check
          %p356 = pneg %p84
        $region46: #{tpu_custom_call.1} parent=39 // pred_check_branch
          %358 = sbr.rel (%p356) target = $region48
        $region47: #{tpu_custom_call.1} parent=39 // pred_region
          #allocation14 [shape = 'u32[6]{0}', space=smem, size = 0x18, scoped, tag = 'DMA stride descriptor']
          %s359 = sand.u32 %s22, 1
          %s360 = scalar_lea.sflag [#allocation9], %s359
          %s361 = sand.u32 %s74, 1
          %s362 = smul.addr %s361, 16
          %s363 = scalar_lea.vmem [#allocation8], %s362
          %s364 = smul.u32 2, %s29
          %s365 = smul.u32 2, %s30
          %s367 = ssub.s32 256, 256
          %368 = vsyncadd %s360, %s367
          %s369 = smul.addr %s364, 4
          %s370 = sadd.s32 %s365, %s369
          %s371 = smul.addr %s370, 64
          %s372 = scalar_lea.hbm %s1, %s371
          %s374 = sshll.u32 1, 14
          %s375 = sxor.u32 4294967295, %s374
          %s377 = sld [smem:[#allocation0]]
          %s378 = sadd.s32 2, %s377
          %s380 = sshll.u32 7, 26
          %s381 = sxor.u32 4294967295, %s380
          %s382 = sand.u32 0, %s381
          %s383 = sshll.u32 %s378, 26
          %s384 = sor.u32 %s382, %s383
          %s385 = sshll.u32 %s363, 4
          %s386 = int_to_ptr.vmem [resolvable:$true] %s385
          %392 = sst [smem:[#allocation14]] 256
          %s393 = scalar_lea.smem [#allocation14], 1
          %394 = sst [smem:[%s393]] 128
          %s395 = scalar_lea.smem [#allocation14], 2
          %396 = sst [smem:[%s395]] 2
          %s397 = scalar_lea.smem [#allocation14], 3
          %398 = sst [smem:[%s397]] 64
          %s399 = scalar_lea.smem [#allocation14], 4
          %400 = sst [smem:[%s399]] 64
          %s401 = scalar_lea.smem [#allocation14], 5
          %402 = sst [smem:[%s401]] 4
          %404 = dma.general %s372, 256, %s386, %s360, [#allocation13], [#allocation14], %s384, 0
        $region48: #{tpu_custom_call.1} parent=39 // pred_fallthru
          _
        // Predicated region
        $region49: #{tpu_custom_call.1} parent=39 // pred_check
          %p405 = pneg %p112
        $region50: #{tpu_custom_call.1} parent=39 // pred_check_branch
          %407 = sbr.rel (%p405) target = $region52
        $region51: #{tpu_custom_call.1} parent=39 // pred_region
          #allocation16 [shape = 'u32[6]{0}', space=smem, size = 0x18, scoped, tag = 'DMA stride descriptor']
          %s408 = sand.u32 %s22, 1
          %s409 = scalar_lea.sflag [#allocation9], %s408
          %s410 = sand.u32 %s102, 1
          %s411 = smul.addr %s410, 16
          %s412 = scalar_lea.vmem [#allocation10], %s411
          %s413 = smul.u32 2, %s29
          %s414 = smul.u32 2, %s30
          %s416 = ssub.s32 256, 256
          %417 = vsyncadd %s409, %s416
          %s418 = smul.addr %s413, 4
          %s419 = sadd.s32 %s414, %s418
          %s420 = smul.addr %s419, 64
          %s421 = scalar_lea.hbm %s2, %s420
          %s423 = sshll.u32 1, 14
          %s424 = sxor.u32 4294967295, %s423
          %s426 = sld [smem:[#allocation0]]
          %s427 = sadd.s32 2, %s426
          %s429 = sshll.u32 7, 26
          %s430 = sxor.u32 4294967295, %s429
          %s431 = sand.u32 0, %s430
          %s432 = sshll.u32 %s427, 26
          %s433 = sor.u32 %s431, %s432
          %s434 = sshll.u32 %s412, 4
          %s435 = int_to_ptr.vmem [resolvable:$true] %s434
          %441 = sst [smem:[#allocation16]] 256
          %s442 = scalar_lea.smem [#allocation16], 1
          %443 = sst [smem:[%s442]] 128
          %s444 = scalar_lea.smem [#allocation16], 2
          %445 = sst [smem:[%s444]] 2
          %s446 = scalar_lea.smem [#allocation16], 3
          %447 = sst [smem:[%s446]] 64
          %s448 = scalar_lea.smem [#allocation16], 4
          %449 = sst [smem:[%s448]] 64
          %s450 = scalar_lea.smem [#allocation16], 5
          %451 = sst [smem:[%s450]] 4
          %453 = dma.general %s421, 256, %s435, %s409, [#allocation15], [#allocation16], %s433, 0
        $region52: #{tpu_custom_call.1} parent=39 // pred_fallthru
          _
      $region40: #{tpu_custom_call.1} parent=5 // pred_fallthru
        _
      %p454 = scmp.le.s32.totalorder 1, %s22
      %p455 = scmp.lt.s32.totalorder %s22, 3
      %p456 = pnand %p454, %p455
      %p457 = pneg %p456
      // Predicated region
      $region53: #{tpu_custom_call.1} parent=5 // pred_check
        _
      $region54: #{tpu_custom_call.1} parent=5 // pred_check_branch
        %459 = sbr.rel (%p456) target = $region56
      $region55: #{tpu_custom_call.1} parent=5 // pred_region
        %s460 = ssub.s32 %s22, 1
        %s461 = sand.u32 %s49, 1
        %s462 = scalar_lea.sflag [#allocation7], %s461
        %s463 = sand.u32 %s49, 1
        %s464 = smul.addr %s463, 16
        %s465 = scalar_lea.vmem [#allocation6], %s464
        // Predicated region
        $region57: #{tpu_custom_call.1} parent=55 // pred_check
          %p466 = pneg %p62
        $region58: #{tpu_custom_call.1} parent=55 // pred_check_branch
          %468 = sbr.rel (%p466) target = $region60
        $region59: #{tpu_custom_call.1} parent=55 // pred_region
          %469 = dma.done %s462, 256
        $region60: #{tpu_custom_call.1} parent=55 // pred_fallthru
          _
        %s470 = sand.u32 %s27, 1
        %s471 = scalar_lea.sflag [#allocation9], %s470
        %s472 = sand.u32 %s77, 1
        %s473 = smul.addr %s472, 16
        %s474 = scalar_lea.vmem [#allocation8], %s473
        // Predicated region
        $region61: #{tpu_custom_call.1} parent=55 // pred_check
          %p475 = pneg %p90
        $region62: #{tpu_custom_call.1} parent=55 // pred_check_branch
          %477 = sbr.rel (%p475) target = $region64
        $region63: #{tpu_custom_call.1} parent=55 // pred_region
          %478 = dma.done %s471, 256
        $region64: #{tpu_custom_call.1} parent=55 // pred_fallthru
          _
        %s479 = sand.u32 %s27, 1
        %s480 = scalar_lea.sflag [#allocation9], %s479
        %s481 = sand.u32 %s105, 1
        %s482 = smul.addr %s481, 16
        %s483 = scalar_lea.vmem [#allocation10], %s482
        // Predicated region
        $region65: #{tpu_custom_call.1} parent=55 // pred_check
          %p484 = pneg %p118
        $region66: #{tpu_custom_call.1} parent=55 // pred_check_branch
          %486 = sbr.rel (%p484) target = $region68
        $region67: #{tpu_custom_call.1} parent=55 // pred_region
          %487 = dma.done %s480, 256
        $region68: #{tpu_custom_call.1} parent=55 // pred_fallthru
          _
        %s488 = sand.u32 %s49, 1
        %s489 = scalar_lea.sflag [#allocation7], %s488
        %s490 = sand.u32 %s49, 1
        %s491 = smul.addr %s490, 16
        %s492 = scalar_lea.vmem [#allocation6], %s491
        %p493 = pneg %p62
        %p494 = pneg %p59
        %s495 = sand.u32 %s27, 1
        %s496 = scalar_lea.sflag [#allocation9], %s495
        %s497 = sand.u32 %s77, 1
        %s498 = smul.addr %s497, 16
        %s499 = scalar_lea.vmem [#allocation8], %s498
        %p500 = pneg %p90
        %p501 = pneg %p87
        %s502 = sand.u32 %s27, 1
        %s503 = scalar_lea.sflag [#allocation9], %s502
        %s504 = sand.u32 %s105, 1
        %s505 = smul.addr %s504, 16
        %s506 = scalar_lea.vmem [#allocation10], %s505
        %p507 = pneg %p118
        %p508 = pneg %p115
        %p509 = pneg %p139
        %p510 = pneg %p136
        %p511 = pneg %p160
        %p512 = pneg %p157
        %p513 = pneg %p181
        %p514 = pneg %p178
        %p515 = pneg %p202
        %p516 = pneg %p199
        %p517 = pneg %p223
        %p518 = pneg %p220
        %p519 = pneg %p244
        %p520 = pneg %p241
        %p521 = pneg %p270
        %p522 = pneg %p267
        %p523 = scmp.lt.s32.totalorder %s31, 0
        %s524 = scalar_select %p523, %s31, 0
        %s525 = smul.addr %s524, 2
        %s526 = scalar_lea.vmem %s9, %s525
        %s527 = smul.u32 2, %s31
        %s528 = smul.u32 2, %s32
        %s529 = smul.u32 2, %s31
        %s530 = smul.u32 2, %s32
        %s531 = smul.u32 2, %s31
        %s532 = smul.u32 2, %s32
        %p533 = scmp.lt.s32.totalorder %s31, 0
        %s534 = scalar_select %p533, %s31, 0
        %s535 = smul.addr %s534, 2
        %s536 = scalar_lea.vmem %s9, %s535
        %p537 = scmp.eq.s32.totalorder %s32, 0
        // Predicated region
        $region69: #{tpu_custom_call.1} parent=55 // pred_check
          %p538 = pneg %p537
        $region70: #{tpu_custom_call.1} parent=55 // pred_check_branch
          %540 = sbr.rel (%p538) target = $region72
        $region71: #{tpu_custom_call.1} parent=55 // pred_region
          %vm541 = vcmask 254976
          %542 = vst.msk [vmem:[#allocation2] sm:$0x3] %vm541, 0.0
          %543 = vst.msk [vmem:[#allocation3] sm:$0x3] %vm541, 0.0
          %544 = vst.msk [vmem:[#allocation4] sm:$0x3] %vm541, 0.0
        $region72: #{tpu_custom_call.1} parent=55 // pred_fallthru
          _
        %v545 = vld [vmem:[#allocation2] sm:$0x3]
        %v546 = vld [vmem:[%s465] sm:$0xf]
        %v547 = vld [vmem:[%s465 + $0x4] sm:$0xf]
        %v548 = vld [vmem:[%s465 + $0x8] sm:$0xf]
        %v549 = vld [vmem:[%s465 + $0xc] sm:$0xf]
        %v550 = vunpack.c.l.bf16 %v546
        %v551 = vunpack.c.l.bf16 %v547
        %v552 = vunpack.c.l.bf16 %v548
        %v553 = vunpack.c.l.bf16 %v549
        %vm554 = vcmask 261120
        %v555 = vsel %vm554, %v550, 0.0
        %556 = vadd.xlane.f32.xlu0 %v555
        %v557 = vpop.xlane.xlu0 %556
        %v558 = vsel %vm554, %v551, 0.0
        %559 = vadd.xlane.f32.xlu0 %v558
        %v560 = vpop.xlane.xlu0 %559
        %v561 = vsel %vm554, %v552, 0.0
        %562 = vadd.xlane.f32.xlu0 %v561
        %v563 = vpop.xlane.xlu0 %562
        %v564 = vsel %vm554, %v553, 0.0
        %565 = vadd.xlane.f32.xlu0 %v564
        %v566 = vpop.xlane.xlu0 %565
        %v567 = vmul.f32 %v557, 0.03125
        %v568 = vmul.f32 %v560, 0.03125
        %v569 = vmul.f32 %v563, 0.03125
        %v570 = vmul.f32 %v566, 0.03125
        %v571 = vmul.f32 %v550, %v550
        %v572 = vmul.f32 %v551, %v551
        %v573 = vmul.f32 %v552, %v552
        %v574 = vmul.f32 %v553, %v553
        %v575 = vsel %vm554, %v571, 0.0
        %576 = vadd.xlane.f32.xlu0 %v575
        %v577 = vpop.xlane.xlu0 %576
        %v578 = vsel %vm554, %v572, 0.0
        %579 = vadd.xlane.f32.xlu0 %v578
        %v580 = vpop.xlane.xlu0 %579
        %v581 = vsel %vm554, %v573, 0.0
        %582 = vadd.xlane.f32.xlu0 %v581
        %v583 = vpop.xlane.xlu0 %582
        %v584 = vsel %vm554, %v574, 0.0
        %585 = vadd.xlane.f32.xlu0 %v584
        %v586 = vpop.xlane.xlu0 %585
        %v587 = vmul.f32 %v577, 0.03125
        %v588 = vmul.f32 %v580, 0.03125
        %v589 = vmul.f32 %v583, 0.03125
        %v590 = vmul.f32 %v586, 0.03125
        %v591 = vmul.f32 %v567, %v567
        %v592 = vmul.f32 %v568, %v568
        %v593 = vmul.f32 %v569, %v569
        %v594 = vmul.f32 %v570, %v570
        %v595 = vsub.f32 %v587, %v591
        %v596 = vsub.f32 %v588, %v592
        %v597 = vsub.f32 %v589, %v593
        %v598 = vsub.f32 %v590, %v594
        %v599 = vsub.f32 %v550, %v567
        %v600 = vsub.f32 %v551, %v568
        %v601 = vsub.f32 %v552, %v569
        %v602 = vsub.f32 %v553, %v570
        %v603 = vadd.f32 %v595, 1e-05
        %v604 = vadd.f32 %v596, 1e-05
        %v605 = vadd.f32 %v597, 1e-05
        %v606 = vadd.f32 %v598, 1e-05
        %v607 = vrsqrt.pop %v603
        %v608 = vrsqrt.pop %v604
        %v609 = vrsqrt.pop %v605
        %v610 = vrsqrt.pop %v606
        %v611 = vmul.f32 %v599, %v607
        %v612 = vmul.f32 %v600, %v608
        %v613 = vmul.f32 %v601, %v609
        %v614 = vmul.f32 %v602, %v610
        %v615 = vsel %vm554, %v611, 0.0
        %v616 = vsel %vm554, %v612, 0.0
        %v617 = vadd.f32 %v615, %v616
        %v618 = vrot.slane %v617, 4
        %v619 = vadd.f32 %v617, %v618
        %v620 = vrot.slane %v619, 2
        %v621 = vadd.f32 %v619, %v620
        %v622 = vrot.slane %v621, 1
        %v623 = vadd.f32 %v621, %v622
        %v624 = vsel %vm554, %v613, 0.0
        %v625 = vsel %vm554, %v614, 0.0
        %v626 = vadd.f32 %v624, %v625
        %v627 = vrot.slane %v626, 4
        %v628 = vadd.f32 %v626, %v627
        %v629 = vrot.slane %v628, 2
        %v630 = vadd.f32 %v628, %v629
        %v631 = vrot.slane %v630, 1
        %v632 = vadd.f32 %v630, %v631
        %vm635 = vcmask 1041409
        %v636 = vsel %vm635, %v632, %v623
        %v638 = vadd.f32 %v545, %v636
        %vm639 = vcmask 254976
        %640 = vst.msk [vmem:[#allocation2] sm:$0x3] %vm639, %v638
        %v641 = vld [vmem:[#allocation3] sm:$0x3]
        %v642 = vld [vmem:[%s474] sm:$0xf]
        %v643 = vld [vmem:[%s474 + $0x4] sm:$0xf]
        %v644 = vld [vmem:[%s474 + $0x8] sm:$0xf]
        %v645 = vld [vmem:[%s474 + $0xc] sm:$0xf]
        %v646 = vunpack.c.l.bf16 %v642
        %v647 = vunpack.c.l.bf16 %v643
        %v648 = vunpack.c.l.bf16 %v644
        %v649 = vunpack.c.l.bf16 %v645
        %v650 = vsel %vm554, %v646, 0.0
        %651 = vadd.xlane.f32.xlu0 %v650
        %v652 = vpop.xlane.xlu0 %651
        %v653 = vsel %vm554, %v647, 0.0
        %654 = vadd.xlane.f32.xlu0 %v653
        %v655 = vpop.xlane.xlu0 %654
        %v656 = vsel %vm554, %v648, 0.0
        %657 = vadd.xlane.f32.xlu0 %v656
        %v658 = vpop.xlane.xlu0 %657
        %v659 = vsel %vm554, %v649, 0.0
        %660 = vadd.xlane.f32.xlu0 %v659
        %v661 = vpop.xlane.xlu0 %660
        %v662 = vmul.f32 %v652, 0.03125
        %v663 = vmul.f32 %v655, 0.03125
        %v664 = vmul.f32 %v658, 0.03125
        %v665 = vmul.f32 %v661, 0.03125
        %v666 = vmul.f32 %v646, %v646
        %v667 = vmul.f32 %v647, %v647
        %v668 = vmul.f32 %v648, %v648
        %v669 = vmul.f32 %v649, %v649
        %v670 = vsel %vm554, %v666, 0.0
        %671 = vadd.xlane.f32.xlu0 %v670
        %v672 = vpop.xlane.xlu0 %671
        %v673 = vsel %vm554, %v667, 0.0
        %674 = vadd.xlane.f32.xlu0 %v673
        %v675 = vpop.xlane.xlu0 %674
        %v676 = vsel %vm554, %v668, 0.0
        %677 = vadd.xlane.f32.xlu0 %v676
        %v678 = vpop.xlane.xlu0 %677
        %v679 = vsel %vm554, %v669, 0.0
        %680 = vadd.xlane.f32.xlu0 %v679
        %v681 = vpop.xlane.xlu0 %680
        %v682 = vmul.f32 %v672, 0.03125
        %v683 = vmul.f32 %v675, 0.03125
        %v684 = vmul.f32 %v678, 0.03125
        %v685 = vmul.f32 %v681, 0.03125
        %v686 = vmul.f32 %v662, %v662
        %v687 = vmul.f32 %v663, %v663
        %v688 = vmul.f32 %v664, %v664
        %v689 = vmul.f32 %v665, %v665
        %v690 = vsub.f32 %v682, %v686
        %v691 = vsub.f32 %v683, %v687
        %v692 = vsub.f32 %v684, %v688
        %v693 = vsub.f32 %v685, %v689
        %v694 = vsub.f32 %v646, %v662
        %v695 = vsub.f32 %v647, %v663
        %v696 = vsub.f32 %v648, %v664
        %v697 = vsub.f32 %v649, %v665
        %v698 = vadd.f32 %v690, 1e-05
        %v699 = vadd.f32 %v691, 1e-05
        %v700 = vadd.f32 %v692, 1e-05
        %v701 = vadd.f32 %v693, 1e-05
        %v702 = vrsqrt.pop %v698
        %v703 = vrsqrt.pop %v699
        %v704 = vrsqrt.pop %v700
        %v705 = vrsqrt.pop %v701
        %v706 = vmul.f32 %v694, %v702
        %v707 = vmul.f32 %v695, %v703
        %v708 = vmul.f32 %v696, %v704
        %v709 = vmul.f32 %v697, %v705
        %v710 = vsel %vm554, %v706, 0.0
        %v711 = vsel %vm554, %v707, 0.0
        %v712 = vadd.f32 %v710, %v711
        %v713 = vrot.slane %v712, 4
        %v714 = vadd.f32 %v712, %v713
        %v715 = vrot.slane %v714, 2
        %v716 = vadd.f32 %v714, %v715
        %v717 = vrot.slane %v716, 1
        %v718 = vadd.f32 %v716, %v717
        %v719 = vsel %vm554, %v708, 0.0
        %v720 = vsel %vm554, %v709, 0.0
        %v721 = vadd.f32 %v719, %v720
        %v722 = vrot.slane %v721, 4
        %v723 = vadd.f32 %v721, %v722
        %v724 = vrot.slane %v723, 2
        %v725 = vadd.f32 %v723, %v724
        %v726 = vrot.slane %v725, 1
        %v727 = vadd.f32 %v725, %v726
        %v730 = vsel %vm635, %v727, %v718
        %v732 = vadd.f32 %v641, %v730
        %733 = vst.msk [vmem:[#allocation3] sm:$0x3] %vm639, %v732
        %v734 = vld [vmem:[#allocation4] sm:$0x3]
        %v735 = vld [vmem:[%s483] sm:$0xf]
        %v736 = vld [vmem:[%s483 + $0x4] sm:$0xf]
        %v737 = vld [vmem:[%s483 + $0x8] sm:$0xf]
        %v738 = vld [vmem:[%s483 + $0xc] sm:$0xf]
        %v739 = vunpack.c.l.bf16 %v735
        %v740 = vunpack.c.l.bf16 %v736
        %v741 = vunpack.c.l.bf16 %v737
        %v742 = vunpack.c.l.bf16 %v738
        %v743 = vsel %vm554, %v739, 0.0
        %744 = vadd.xlane.f32.xlu0 %v743
        %v745 = vpop.xlane.xlu0 %744
        %v746 = vsel %vm554, %v740, 0.0
        %747 = vadd.xlane.f32.xlu0 %v746
        %v748 = vpop.xlane.xlu0 %747
        %v749 = vsel %vm554, %v741, 0.0
        %750 = vadd.xlane.f32.xlu0 %v749
        %v751 = vpop.xlane.xlu0 %750
        %v752 = vsel %vm554, %v742, 0.0
        %753 = vadd.xlane.f32.xlu0 %v752
        %v754 = vpop.xlane.xlu0 %753
        %v755 = vmul.f32 %v745, 0.03125
        %v756 = vmul.f32 %v748, 0.03125
        %v757 = vmul.f32 %v751, 0.03125
        %v758 = vmul.f32 %v754, 0.03125
        %v759 = vmul.f32 %v739, %v739
        %v760 = vmul.f32 %v740, %v740
        %v761 = vmul.f32 %v741, %v741
        %v762 = vmul.f32 %v742, %v742
        %v763 = vsel %vm554, %v759, 0.0
        %764 = vadd.xlane.f32.xlu0 %v763
        %v765 = vpop.xlane.xlu0 %764
        %v766 = vsel %vm554, %v760, 0.0
        %767 = vadd.xlane.f32.xlu0 %v766
        %v768 = vpop.xlane.xlu0 %767
        %v769 = vsel %vm554, %v761, 0.0
        %770 = vadd.xlane.f32.xlu0 %v769
        %v771 = vpop.xlane.xlu0 %770
        %v772 = vsel %vm554, %v762, 0.0
        %773 = vadd.xlane.f32.xlu0 %v772
        %v774 = vpop.xlane.xlu0 %773
        %v775 = vmul.f32 %v765, 0.03125
        %v776 = vmul.f32 %v768, 0.03125
        %v777 = vmul.f32 %v771, 0.03125
        %v778 = vmul.f32 %v774, 0.03125
        %v779 = vmul.f32 %v755, %v755
        %v780 = vmul.f32 %v756, %v756
        %v781 = vmul.f32 %v757, %v757
        %v782 = vmul.f32 %v758, %v758
        %v783 = vsub.f32 %v775, %v779
        %v784 = vsub.f32 %v776, %v780
        %v785 = vsub.f32 %v777, %v781
        %v786 = vsub.f32 %v778, %v782
        %v787 = vsub.f32 %v739, %v755
        %v788 = vsub.f32 %v740, %v756
        %v789 = vsub.f32 %v741, %v757
        %v790 = vsub.f32 %v742, %v758
        %v791 = vadd.f32 %v783, 1e-05
        %v792 = vadd.f32 %v784, 1e-05
        %v793 = vadd.f32 %v785, 1e-05
        %v794 = vadd.f32 %v786, 1e-05
        %v795 = vrsqrt.pop %v791
        %v796 = vrsqrt.pop %v792
        %v797 = vrsqrt.pop %v793
        %v798 = vrsqrt.pop %v794
        %v799 = vmul.f32 %v787, %v795
        %v800 = vmul.f32 %v788, %v796
        %v801 = vmul.f32 %v789, %v797
        %v802 = vmul.f32 %v790, %v798
        %v803 = vsel %vm554, %v799, 0.0
        %v804 = vsel %vm554, %v800, 0.0
        %v805 = vadd.f32 %v803, %v804
        %v806 = vrot.slane %v805, 4
        %v807 = vadd.f32 %v805, %v806
        %v808 = vrot.slane %v807, 2
        %v809 = vadd.f32 %v807, %v808
        %v810 = vrot.slane %v809, 1
        %v811 = vadd.f32 %v809, %v810
        %v812 = vsel %vm554, %v801, 0.0
        %v813 = vsel %vm554, %v802, 0.0
        %v814 = vadd.f32 %v812, %v813
        %v815 = vrot.slane %v814, 4
        %v816 = vadd.f32 %v814, %v815
        %v817 = vrot.slane %v816, 2
        %v818 = vadd.f32 %v816, %v817
        %v819 = vrot.slane %v818, 1
        %v820 = vadd.f32 %v818, %v819
        %v823 = vsel %vm635, %v820, %v811
        %v825 = vadd.f32 %v734, %v823
        %826 = vst.msk [vmem:[#allocation4] sm:$0x3] %vm639, %v825
        %p827 = scmp.eq.s32.totalorder %s32, 1
        // Predicated region
        $region73: #{tpu_custom_call.1} parent=55 // pred_check
          %p828 = pneg %p827
        $region74: #{tpu_custom_call.1} parent=55 // pred_check_branch
          %830 = sbr.rel (%p828) target = $region76
        $region75: #{tpu_custom_call.1} parent=55 // pred_region
          %v831 = vld [vmem:[%s3] sm:$0x1]
          %v832 = vld [vmem:[%s4] sm:$0x1]
          %v833 = vld [vmem:[#allocation2] sm:$0x3]
          %v834 = vmul.f32 %v833, 0.03125
          %v836 = vlaneseq
          %v837 = vshrl.u32 %v836, 7
          %v838 = vsub.s32 0, %v837
          %v839 = vrot.slane %v831, %v838
          %v841 = vmul.f32 %v834, %v839
          %v843 = vlaneseq
          %v844 = vshrl.u32 %v843, 7
          %v845 = vsub.s32 0, %v844
          %v846 = vrot.slane %v832, %v845
          %v848 = vadd.f32 %v841, %v846
          %v849 = vld [vmem:[#allocation3] sm:$0x3]
          %v850 = vmul.f32 %v849, 0.03125
          %v851 = vmul.f32 %v850, %v839
          %v852 = vadd.f32 %v851, %v846
          %v853 = vld [vmem:[#allocation4] sm:$0x3]
          %v854 = vmul.f32 %v853, 0.03125
          %v855 = vmul.f32 %v854, %v839
          %v856 = vadd.f32 %v855, %v846
          %v857 = vld [vmem:[%s5] sm:$0x1]
          %v859 = vlaneseq
          %v860 = vshrl.u32 %v859, 7
          %v861 = vsub.s32 0, %v860
          %v862 = vrot.slane %v857, %v861
          %v864 = vmul.f32 %v848, %v862
          %v865 = vsel %vm639, %v864, 0.0
          %866 = vadd.xlane.f32.xlu0 %v865
          %v867 = vpop.xlane.xlu0 %866
          %v868 = vld [vmem:[%s6] sm:$0x1]
          %v870 = vlaneseq
          %v871 = vshrl.u32 %v870, 7
          %v872 = vsub.s32 0, %v871
          %v873 = vrot.slane %v868, %v872
          %v875 = vmul.f32 %v852, %v873
          %v876 = vsel %vm639, %v875, 0.0
          %877 = vadd.xlane.f32.xlu0 %v876
          %v878 = vpop.xlane.xlu0 %877
          %v879 = vadd.f32 %v867, %v878
          %v880 = vld [vmem:[%s7] sm:$0x1]
          %v882 = vlaneseq
          %v883 = vshrl.u32 %v882, 7
          %v884 = vsub.s32 0, %v883
          %v885 = vrot.slane %v880, %v884
          %v887 = vmul.f32 %v856, %v885
          %v888 = vsel %vm639, %v887, 0.0
          %889 = vadd.xlane.f32.xlu0 %v888
          %v890 = vpop.xlane.xlu0 %889
          %v891 = vadd.f32 %v879, %v890
          %s892 = sld [smem:[#allocation5]]
          %v893 = vstv %s892
          %v894 = vadd.f32 %v891, %v893
          %vm895 = vcmask 1024
          %896 = vst.msk [vmem:[%s536] sm:$0x3] %vm895, %v894
        $region76: #{tpu_custom_call.1} parent=55 // pred_fallthru
          _
        %p897 = scmp.lt.s32.totalorder %s31, 0
        %s898 = scalar_select %p897, %s31, 0
        %s899 = smul.addr %s898, 2
        %s900 = scalar_lea.vmem %s9, %s899
        // Predicated region
        $region77: #{tpu_custom_call.1} parent=55 // pred_check
          %p901 = pneg %p267
        $region78: #{tpu_custom_call.1} parent=55 // pred_check_branch
          %903 = sbr.rel (%p901) target = $region80
        $region79: #{tpu_custom_call.1} parent=55 // pred_region
          _
        $region80: #{tpu_custom_call.1} parent=55 // pred_fallthru
          _
        // Predicated region
        $region81: #{tpu_custom_call.1} parent=55 // pred_check
          %p904 = pneg %p267
        $region82: #{tpu_custom_call.1} parent=55 // pred_check_branch
          %906 = sbr.rel (%p904) target = $region84
        $region83: #{tpu_custom_call.1} parent=55 // pred_region
          %p907 = scmp.lt.s32.totalorder %s31, 0
          %s908 = scalar_select %p907, %s31, 0
          %s909 = smul.addr %s908, 2
          %s910 = scalar_lea.vmem %s9, %s909
        $region84: #{tpu_custom_call.1} parent=55 // pred_fallthru
          _
      $region56: #{tpu_custom_call.1} parent=5 // pred_fallthru
        _
      %p911 = scmp.le.s32.totalorder 2, %s22
      // Predicated region
      $region85: #{tpu_custom_call.1} parent=5 // pred_check
        %p912 = pneg %p911
      $region86: #{tpu_custom_call.1} parent=5 // pred_check_branch
        %914 = sbr.rel (%p912) target = $region88
      $region87: #{tpu_custom_call.1} parent=5 // pred_region
        %s915 = ssub.s32 %s22, 2
      $region88: #{tpu_custom_call.1} parent=5 // pred_fallthru
        _
    $region6: #{tpu_custom_call.1} parent=1 // loop_footer
      %s26 = sadd.s32 1, %s22
    $region7: #{tpu_custom_call.1} parent=1 // loop_footer_branch
      %21 = sbr.rel target = $region3
    $region8: #{tpu_custom_call.1} parent=1 // loop_exit
      _
    %916 = vsyncpa [#allocation7], 1
    %s917 = scalar_lea.sflag [#allocation7], 1
    %918 = vsyncpa %s917, 1
    %919 = vsyncpa [#allocation9], 1
    %s920 = scalar_lea.sflag [#allocation9], 1
    %921 = vsyncpa %s920, 1

</llo_original>
